<compile_context>
chip_gen: v6e
topology: v6e:2x2x1
jax: 0.10.0
libtpu: 0.0.40
codegen_flags: <defaults>
</compile_context>

<pallas_src>
import jax
import jax.numpy as jnp
from jax.experimental import pallas as pl
from jax.experimental.pallas import tpu as pltpu

HIDDEN = 24  # matches torch.nn.Linear(nb_states, 24) / Linear(24, 24)


def _round_up(x, m):
    return (x + m - 1) // m * m


def dqn_kernel(x_ref, w1_ref, b1_ref, w2_ref, b2_ref, w3_ref, b3_ref, o_ref):
    # Three MXU matmuls (bf16 in, f32 accumulate) + VPU bias/ReLU on the f32 accumulator.
    x = x_ref[...].astype(jnp.bfloat16)                                   # (TB, S) f32 -> bf16
    h1 = jnp.dot(x, w1_ref[...], preferred_element_type=jnp.float32) + b1_ref[...]
    h1 = jnp.maximum(h1, 0.0).astype(jnp.bfloat16)                        # (TB, Hp)
    h2 = jnp.dot(h1, w2_ref[...], preferred_element_type=jnp.float32) + b2_ref[...]
    h2 = jnp.maximum(h2, 0.0).astype(jnp.bfloat16)                        # (TB, Hp)
    q = jnp.dot(h2, w3_ref[...], preferred_element_type=jnp.float32) + b3_ref[...]
    o_ref[...] = q.astype(jnp.bfloat16)                                   # bf16 store: halves HBM writeback


def prepare_dqn_params(params, nb_states, nb_actions):
    """One-time (load-time) pad + transpose + bf16 cast of torch-layout Linear params.

    torch Linear weight is (out, in); we store (in, out) so the kernel computes y = x @ W + b.
    Zero padding of the hidden/action lanes is mathematically inert through matmul+bias+ReLU.
    """
    S, H, A = nb_states, HIDDEN, nb_actions
    Hp = _round_up(H, 128)
    Ap = _round_up(A, 128)
    bf16, f32 = jnp.bfloat16, jnp.float32
    w1 = jnp.zeros((S, Hp), bf16).at[:, :H].set(params["w1"].T.astype(bf16))
    b1 = jnp.zeros((1, Hp), f32).at[0, :H].set(params["b1"].astype(f32))
    w2 = jnp.zeros((Hp, Hp), bf16).at[:H, :H].set(params["w2"].T.astype(bf16))
    b2 = jnp.zeros((1, Hp), f32).at[0, :H].set(params["b2"].astype(f32))
    w3 = jnp.zeros((Hp, Ap), bf16).at[:H, :A].set(params["w3"].T.astype(bf16))
    b3 = jnp.zeros((1, Ap), f32).at[0, :A].set(params["b3"].astype(f32))
    return {"w1": w1, "b1": b1, "w2": w2, "b2": b2, "w3": w3, "b3": b3}


def _pick_tiles(B):
    """Balanced batch tiling: n tiles of TB rows, Bp = n*TB >= B.

    - n = cdiv(B, 2048): per-step overhead amortized over big tiles.
    - n >= 2 (even) for B >= 256 so v7x megacore gets both TCs busy; neutral on v5e/v6e.
    - n == 1: TB = B exactly (block dim == full array dim is legal), so no padding at all.
    """
    n = pl.cdiv(B, 2048)
    if B >= 256:
        n = max(n, 2)
    if n > 1 and n % 2:
        n += 1
    if n == 1:
        return B, B
    TB = _round_up(pl.cdiv(B, n), 16)
    return TB, n * TB


@jax.jit
def dqn_forward_padded(x, padded_params):
    """Hot path. x: (B, nb_states) float32.

    Returns the padded (Bp, 128) bfloat16 Q buffer:
      - rows >= B (only possible when the batch was padded to a tile multiple) are garbage,
      - lanes >= nb_actions are garbage.
    Consumers (argmax / TD targets) should index lanes 0..nb_actions-1 lazily.
    """
    B, S = x.shape
    Hp = padded_params["w2"].shape[0]
    Ap = padded_params["w3"].shape[1]

    TB, Bp = _pick_tiles(B)
    xp = x
    if Bp != B:
        xp = jnp.zeros((Bp, S), x.dtype).at[:B].set(x)

    const = lambda i: (0, 0)  # weights/biases: constant block index -> stay VMEM-resident
    return pl.pallas_call(
        dqn_kernel,
        out_shape=jax.ShapeDtypeStruct((Bp, Ap), jnp.bfloat16),
        grid=(Bp // TB,),
        in_specs=[
            pl.BlockSpec((TB, S), lambda i: (i, 0)),   # x: batch-tiled, feature dim unpadded, f32
            pl.BlockSpec((S, Hp), const),
            pl.BlockSpec((1, Hp), const),
            pl.BlockSpec((Hp, Hp), const),
            pl.BlockSpec((1, Hp), const),
            pl.BlockSpec((Hp, Ap), const),
            pl.BlockSpec((1, Ap), const),
        ],
        out_specs=pl.BlockSpec((TB, Ap), lambda i: (i, 0)),
        compiler_params=pltpu.CompilerParams(dimension_semantics=("parallel",)),
    )(
        xp,
        padded_params["w1"], padded_params["b1"],
        padded_params["w2"], padded_params["b2"],
        padded_params["w3"], padded_params["b3"],
    )


def dqn_forward(x, padded_params, nb_actions):
    """Torch-semantics convenience wrapper: returns (B, nb_actions) float32 Q-values.

    Prefer dqn_forward_padded + lazy lane indexing in hot loops to avoid the slice pass.
    """
    q = dqn_forward_padded(x, padded_params)
    return q[: x.shape[0], :nb_actions].astype(jnp.float32)


def init_dqn_params(key, nb_states, nb_actions):
    """Deterministic init mimicking torch.nn.Linear's U(-1/sqrt(fan_in), 1/sqrt(fan_in))."""
    ks = jax.random.split(key, 6)

    def lin(kw, kb, fan_in, fan_out):
        bound = 1.0 / jnp.sqrt(jnp.float32(fan_in))
        w = jax.random.uniform(kw, (fan_out, fan_in), jnp.float32, -bound, bound)
        b = jax.random.uniform(kb, (fan_out,), jnp.float32, -bound, bound)
        return w, b

    w1, b1 = lin(ks[0], ks[1], nb_states, HIDDEN)
    w2, b2 = lin(ks[2], ks[3], HIDDEN, HIDDEN)
    w3, b3 = lin(ks[4], ks[5], HIDDEN, nb_actions)
    return {"w1": w1, "b1": b1, "w2": w2, "b2": b2, "w3": w3, "b3": b3}


if __name__ == "__main__":
    nb_states, nb_actions = 4, 2   # CartPole-sized DQN
    batch = 2

    key = jax.random.PRNGKey(0)
    k_params, k_x = jax.random.split(key)
    params = init_dqn_params(k_params, nb_states, nb_actions)
    padded_params = prepare_dqn_params(params, nb_states, nb_actions)  # once, outside hot path
    x = jax.random.normal(k_x, (batch, nb_states), jnp.float32)

    out = jax.block_until_ready(dqn_forward(x, padded_params, nb_actions))
    assert out.shape == (batch, nb_actions)

    # Reference 1: same bf16-rounded weights/activations/output, f32 accumulation (tight-ish).
    def bf(a):
        return a.astype(jnp.bfloat16).astype(jnp.float32)

    h = jnp.maximum(bf(x) @ bf(params["w1"].T) + params["b1"], 0.0)
    h = jnp.maximum(bf(h) @ bf(params["w2"].T) + params["b2"], 0.0)
    ref_bf16 = bf(bf(h) @ bf(params["w3"].T) + params["b3"])
    assert jnp.allclose(out, ref_bf16, atol=2e-2, rtol=2e-2)

    # Reference 2: pure-f32 PyTorch-equivalent forward (loose tolerance for bf16 MXU/store).
    h = jnp.maximum(x @ params["w1"].T + params["b1"], 0.0)
    h = jnp.maximum(h @ params["w2"].T + params["b2"], 0.0)
    ref_f32 = h @ params["w3"].T + params["b3"]
    assert jnp.allclose(out, ref_f32, atol=5e-2, rtol=5e-2)

    print("KERNEL_OK")
</pallas_src>

<mosaic_0001>
module attributes {stable_mosaic.version = 11 : i64} {
  func.func @dqn_kernel(%arg0: i32, %arg1: memref<2x4xf32, #tpu.memory_space<vmem>>, %arg2: memref<4x128xbf16, #tpu.memory_space<vmem>>, %arg3: memref<1x128xf32, #tpu.memory_space<vmem>>, %arg4: memref<128x128xbf16, #tpu.memory_space<vmem>>, %arg5: memref<1x128xf32, #tpu.memory_space<vmem>>, %arg6: memref<128x128xbf16, #tpu.memory_space<vmem>>, %arg7: memref<1x128xf32, #tpu.memory_space<vmem>>, %arg8: memref<2x128xbf16, #tpu.memory_space<vmem>>) attributes {dimension_semantics = [#tpu.dimension_semantics<parallel>], iteration_bounds = array<i64: 1>, scalar_prefetch = 0 : i64, scratch_operands = 0 : i64, tpu.core_type = #tpu.core_type<tc>, window_params = [{transform_indices = @transform_0, window_bounds = array<i64: 2, 4>}, {pipeline_mode = #tpu.pipeline_mode<synchronous>, transform_indices = @transform_1, window_bounds = array<i64: 4, 128>}, {pipeline_mode = #tpu.pipeline_mode<synchronous>, transform_indices = @transform_2, window_bounds = array<i64: 1, 128>}, {pipeline_mode = #tpu.pipeline_mode<synchronous>, transform_indices = @transform_3, window_bounds = array<i64: 128, 128>}, {pipeline_mode = #tpu.pipeline_mode<synchronous>, transform_indices = @transform_4, window_bounds = array<i64: 1, 128>}, {pipeline_mode = #tpu.pipeline_mode<synchronous>, transform_indices = @transform_5, window_bounds = array<i64: 128, 128>}, {pipeline_mode = #tpu.pipeline_mode<synchronous>, transform_indices = @transform_6, window_bounds = array<i64: 1, 128>}, {transform_indices = @transform_7, window_bounds = array<i64: 2, 128>}]} {
    %c0 = arith.constant 0 : index
    %c0_0 = arith.constant 0 : index
    %0 = vector.load %arg1[%c0, %c0_0] : memref<2x4xf32, #tpu.memory_space<vmem>>, vector<2x4xf32>
    %1 = arith.truncf %0 : vector<2x4xf32> to vector<2x4xbf16>
    %c0_1 = arith.constant 0 : index
    %c0_2 = arith.constant 0 : index
    %2 = vector.load %arg2[%c0_1, %c0_2] : memref<4x128xbf16, #tpu.memory_space<vmem>>, vector<4x128xbf16>
    %cst = arith.constant dense<0.000000e+00> : vector<2x128xf32>
    %3 = tpu.matmul %1, %2, %cst {dimension_numbers = #tpu.dot_dimension_numbers<[1], [0], [0], [1], [0, 0, 1, 1], [], []>} : vector<2x4xbf16>, vector<4x128xbf16>, vector<2x128xf32> -> vector<2x128xf32>
    %c0_3 = arith.constant 0 : index
    %c0_4 = arith.constant 0 : index
    %4 = vector.load %arg3[%c0_3, %c0_4] : memref<1x128xf32, #tpu.memory_space<vmem>>, vector<1x128xf32>
    %5 = vector.broadcast %4 : vector<1x128xf32> to vector<2x128xf32>
    %6 = arith.addf %3, %5 : vector<2x128xf32>
    %cst_5 = arith.constant 0.000000e+00 : f32
    %7 = vector.broadcast %cst_5 : f32 to vector<2x128xf32>
    %8 = arith.maximumf %6, %7 : vector<2x128xf32>
    %9 = arith.truncf %8 : vector<2x128xf32> to vector<2x128xbf16>
    %c0_6 = arith.constant 0 : index
    %c0_7 = arith.constant 0 : index
    %10 = vector.load %arg4[%c0_6, %c0_7] : memref<128x128xbf16, #tpu.memory_space<vmem>>, vector<128x128xbf16>
    %cst_8 = arith.constant dense<0.000000e+00> : vector<2x128xf32>
    %11 = tpu.matmul %9, %10, %cst_8 {dimension_numbers = #tpu.dot_dimension_numbers<[1], [0], [0], [1], [0, 0, 1, 1], [], []>} : vector<2x128xbf16>, vector<128x128xbf16>, vector<2x128xf32> -> vector<2x128xf32>
    %c0_9 = arith.constant 0 : index
    %c0_10 = arith.constant 0 : index
    %12 = vector.load %arg5[%c0_9, %c0_10] : memref<1x128xf32, #tpu.memory_space<vmem>>, vector<1x128xf32>
    %13 = vector.broadcast %12 : vector<1x128xf32> to vector<2x128xf32>
    %14 = arith.addf %11, %13 : vector<2x128xf32>
    %cst_11 = arith.constant 0.000000e+00 : f32
    %15 = vector.broadcast %cst_11 : f32 to vector<2x128xf32>
    %16 = arith.maximumf %14, %15 : vector<2x128xf32>
    %17 = arith.truncf %16 : vector<2x128xf32> to vector<2x128xbf16>
    %c0_12 = arith.constant 0 : index
    %c0_13 = arith.constant 0 : index
    %18 = vector.load %arg6[%c0_12, %c0_13] : memref<128x128xbf16, #tpu.memory_space<vmem>>, vector<128x128xbf16>
    %cst_14 = arith.constant dense<0.000000e+00> : vector<2x128xf32>
    %19 = tpu.matmul %17, %18, %cst_14 {dimension_numbers = #tpu.dot_dimension_numbers<[1], [0], [0], [1], [0, 0, 1, 1], [], []>} : vector<2x128xbf16>, vector<128x128xbf16>, vector<2x128xf32> -> vector<2x128xf32>
    %c0_15 = arith.constant 0 : index
    %c0_16 = arith.constant 0 : index
    %20 = vector.load %arg7[%c0_15, %c0_16] : memref<1x128xf32, #tpu.memory_space<vmem>>, vector<1x128xf32>
    %21 = vector.broadcast %20 : vector<1x128xf32> to vector<2x128xf32>
    %22 = arith.addf %19, %21 : vector<2x128xf32>
    %23 = arith.truncf %22 : vector<2x128xf32> to vector<2x128xbf16>
    %c0_17 = arith.constant 0 : index
    %c0_18 = arith.constant 0 : index
    %24 = vector.load %arg8[%c0_17, %c0_18] : memref<2x128xbf16, #tpu.memory_space<vmem>>, vector<2x128xbf16>
    tpu.vector_store %arg8[%c0_17, %c0_18], %23 {strides = array<i32>} : memref<2x128xbf16, #tpu.memory_space<vmem>>, vector<2x128xbf16>,
    return
  }
  func.func @transform_0(%arg0: i32) -> (i32, i32) {
    %c0_i32 = arith.constant 0 : i32
    %c0_i32_0 = arith.constant 0 : i32
    return %arg0, %c0_i32 : i32, i32
  }
  func.func @transform_1(%arg0: i32) -> (i32, i32) {
    %c0_i32 = arith.constant 0 : i32
    %c0_i32_0 = arith.constant 0 : i32
    %c0_i32_1 = arith.constant 0 : i32
    return %c0_i32, %c0_i32_0 : i32, i32
  }
  func.func @transform_2(%arg0: i32) -> (i32, i32) {
    %c0_i32 = arith.constant 0 : i32
    %c0_i32_0 = arith.constant 0 : i32
    %c0_i32_1 = arith.constant 0 : i32
    return %c0_i32, %c0_i32_0 : i32, i32
  }
  func.func @transform_3(%arg0: i32) -> (i32, i32) {
    %c0_i32 = arith.constant 0 : i32
    %c0_i32_0 = arith.constant 0 : i32
    %c0_i32_1 = arith.constant 0 : i32
    return %c0_i32, %c0_i32_0 : i32, i32
  }
  func.func @transform_4(%arg0: i32) -> (i32, i32) {
    %c0_i32 = arith.constant 0 : i32
    %c0_i32_0 = arith.constant 0 : i32
    %c0_i32_1 = arith.constant 0 : i32
    return %c0_i32, %c0_i32_0 : i32, i32
  }
  func.func @transform_5(%arg0: i32) -> (i32, i32) {
    %c0_i32 = arith.constant 0 : i32
    %c0_i32_0 = arith.constant 0 : i32
    %c0_i32_1 = arith.constant 0 : i32
    return %c0_i32, %c0_i32_0 : i32, i32
  }
  func.func @transform_6(%arg0: i32) -> (i32, i32) {
    %c0_i32 = arith.constant 0 : i32
    %c0_i32_0 = arith.constant 0 : i32
    %c0_i32_1 = arith.constant 0 : i32
    return %c0_i32, %c0_i32_0 : i32, i32
  }
  func.func @transform_7(%arg0: i32) -> (i32, i32) {
    %c0_i32 = arith.constant 0 : i32
    %c0_i32_0 = arith.constant 0 : i32
    return %arg0, %c0_i32 : i32, i32
  }
}

</mosaic_0001>

<llo_original>
// kernel: dqn_forward_padded.1
$region0: #{dqn_forward_padded.1}
  #allocation0 [shape = 'u32[]', space=smem, size = 0x4, offset = 0x4, fixed_abs, tag = 'smem constant byte address 0x4 - core index']
  #allocation1 [shape = 'u32[144,128]{1,0:T(1,128)}', space=vmem, size = 0x12000, scoped, tag = 'internal scratch']
  %s0 = inlined_call_operand.hbm [shape: f32[2,4], index: 0, kind: input, shape index: {}]
  %s1 = inlined_call_operand.vmem [shape: bf16[4,128], index: 1, kind: input, shape index: {}]
  %s2 = inlined_call_operand.vmem [shape: f32[1,128], index: 2, kind: input, shape index: {}]
  %s3 = inlined_call_operand.hbm [shape: bf16[128,128], index: 3, kind: input, shape index: {}]
  %s4 = inlined_call_operand.hbm [shape: f32[1,128], index: 4, kind: input, shape index: {}]
  %s5 = inlined_call_operand.hbm [shape: bf16[128,128], index: 5, kind: input, shape index: {}]
  %s6 = inlined_call_operand.vmem [shape: f32[1,128], index: 6, kind: input, shape index: {}]
  %s7 = inlined_call_operand.hbm [shape: bf16[2,128], index: 7, kind: output, shape index: {}]
  %s8 = sld [smem:[#allocation0]]
  $region54: #{dqn_forward_padded.1} parent=0
    _
  %s10 = ssub.s32 1, %s8
  %s11 = scalar_select 0, %s10, %s8
  $region1: #{dqn_forward_padded.1} parent=0
    #allocation2 [shape = 'u8[1024]{0}', space=vmem, size = 0x400, scoped, tag = 'input window, operand 0, single buffered']
    #allocation3 [shape = 's32[1]{0}', space=sflag, size = 0x4, scoped, tag = 'scoped memory for dqn_forward_padded.1']
    #allocation4 [shape = 's32[1]{0}', space=sflag, size = 0x4, scoped, tag = 'scoped memory for dqn_forward_padded.1']
    #allocation5 [shape = 'u8[32768]{0}', space=vmem, size = 0x8000, scoped, tag = 'input window, operand 3, single buffered']
    #allocation6 [shape = 's32[1]{0}', space=sflag, size = 0x4, scoped, tag = 'scoped memory for dqn_forward_padded.1']
    #allocation7 [shape = 'u8[512]{0}', space=vmem, size = 0x400, scoped, tag = 'input window, operand 4, single buffered']
    #allocation8 [shape = 'u8[32768]{0}', space=vmem, size = 0x8000, scoped, tag = 'input window, operand 5, single buffered']
    #allocation9 [shape = 's32[1]{0}', space=sflag, size = 0x4, scoped, tag = 'scoped memory for dqn_forward_padded.1']
    #allocation10 [shape = 'u8[512]{0}', space=vmem, size = 0x400, scoped, tag = 'output window, operand 0, single buffered']
    %12 = vsyncpa [#allocation3], 0
    %13 = vsyncpa [#allocation6], 0
    %14 = vsyncpa [#allocation9], 0
    %15 = vsyncpa [#allocation4], 0
    // Predicated region
    $region2: #{dqn_forward_padded.1} parent=1 // pred_check
      _
    $region3: #{dqn_forward_padded.1} parent=1 // pred_check_branch
      %17 = sbr.rel (0) target = $region5
    $region4: #{dqn_forward_padded.1} parent=1 // pred_region
      %s19 = ssub.s32 32, 32
      %20 = vsyncadd [#allocation3], %s19
      %s22 = sshll.u32 [#allocation2], 4
      %s23 = int_to_ptr.vmem [resolvable:$true] %s22
      %25 = dma.hbm_to_vmem [thread:$0]  %s0, 32, %s23, [#allocation3]
    $region5: #{dqn_forward_padded.1} parent=1 // pred_fallthru
      _
    // Predicated region
    $region6: #{dqn_forward_padded.1} parent=1 // pred_check
      _
    $region7: #{dqn_forward_padded.1} parent=1 // pred_check_branch
      %27 = sbr.rel (0) target = $region9
    $region8: #{dqn_forward_padded.1} parent=1 // pred_region
      _
    $region9: #{dqn_forward_padded.1} parent=1 // pred_fallthru
      _
    // Predicated region
    $region10: #{dqn_forward_padded.1} parent=1 // pred_check
      _
    $region11: #{dqn_forward_padded.1} parent=1 // pred_check_branch
      %29 = sbr.rel (0) target = $region13
    $region12: #{dqn_forward_padded.1} parent=1 // pred_region
      _
    $region13: #{dqn_forward_padded.1} parent=1 // pred_fallthru
      _
    // Predicated region
    $region14: #{dqn_forward_padded.1} parent=1 // pred_check
      _
    $region15: #{dqn_forward_padded.1} parent=1 // pred_check_branch
      %31 = sbr.rel (0) target = $region17
    $region16: #{dqn_forward_padded.1} parent=1 // pred_region
      %s33 = ssub.s32 1024, 1024
      %34 = vsyncadd [#allocation6], %s33
      %s35 = sshll.u32 [#allocation5], 4
      %s36 = int_to_ptr.vmem [resolvable:$true] %s35
      %41 = dma.hbm_to_vmem [thread:$0]  %s3, 1024, %s36, [#allocation6], 64, 64, 4
    $region17: #{dqn_forward_padded.1} parent=1 // pred_fallthru
      _
    // Predicated region
    $region18: #{dqn_forward_padded.1} parent=1 // pred_check
      _
    $region19: #{dqn_forward_padded.1} parent=1 // pred_check_branch
      %43 = sbr.rel (0) target = $region21
    $region20: #{dqn_forward_padded.1} parent=1 // pred_region
      %s45 = ssub.s32 16, 16
      %46 = vsyncadd [#allocation6], %s45
      %s48 = sshll.u32 [#allocation7], 4
      %s49 = int_to_ptr.vmem [resolvable:$true] %s48
      %51 = dma.hbm_to_vmem [thread:$0]  %s4, 16, %s49, [#allocation6]
    $region21: #{dqn_forward_padded.1} parent=1 // pred_fallthru
      _
    // Predicated region
    $region22: #{dqn_forward_padded.1} parent=1 // pred_check
      _
    $region23: #{dqn_forward_padded.1} parent=1 // pred_check_branch
      %53 = sbr.rel (0) target = $region25
    $region24: #{dqn_forward_padded.1} parent=1 // pred_region
      %s55 = ssub.s32 1024, 1024
      %56 = vsyncadd [#allocation9], %s55
      %s57 = sshll.u32 [#allocation8], 4
      %s58 = int_to_ptr.vmem [resolvable:$true] %s57
      %63 = dma.hbm_to_vmem [thread:$0]  %s5, 1024, %s58, [#allocation9], 64, 64, 4
    $region25: #{dqn_forward_padded.1} parent=1 // pred_fallthru
      _
    // Predicated region
    $region26: #{dqn_forward_padded.1} parent=1 // pred_check
      _
    $region27: #{dqn_forward_padded.1} parent=1 // pred_check_branch
      %65 = sbr.rel (0) target = $region29
    $region28: #{dqn_forward_padded.1} parent=1 // pred_region
      _
    $region29: #{dqn_forward_padded.1} parent=1 // pred_fallthru
      _
    // Predicated region
    $region30: #{dqn_forward_padded.1} parent=1 // pred_check
      _
    $region31: #{dqn_forward_padded.1} parent=1 // pred_check_branch
      %67 = sbr.rel (0) target = $region33
    $region32: #{dqn_forward_padded.1} parent=1 // pred_region
      %68 = dma.done [#allocation3], 32
    $region33: #{dqn_forward_padded.1} parent=1 // pred_fallthru
      _
    // Predicated region
    $region34: #{dqn_forward_padded.1} parent=1 // pred_check
      _
    $region35: #{dqn_forward_padded.1} parent=1 // pred_check_branch
      %70 = sbr.rel (0) target = $region37
    $region36: #{dqn_forward_padded.1} parent=1 // pred_region
      %71 = dma.done [#allocation6], 1024
    $region37: #{dqn_forward_padded.1} parent=1 // pred_fallthru
      _
    // Predicated region
    $region38: #{dqn_forward_padded.1} parent=1 // pred_check
      _
    $region39: #{dqn_forward_padded.1} parent=1 // pred_check_branch
      %73 = sbr.rel (0) target = $region41
    $region40: #{dqn_forward_padded.1} parent=1 // pred_region
      %74 = dma.done [#allocation6], 16
    $region41: #{dqn_forward_padded.1} parent=1 // pred_fallthru
      _
    // Predicated region
    $region42: #{dqn_forward_padded.1} parent=1 // pred_check
      _
    $region43: #{dqn_forward_padded.1} parent=1 // pred_check_branch
      %76 = sbr.rel (0) target = $region45
    $region44: #{dqn_forward_padded.1} parent=1 // pred_region
      %77 = dma.done [#allocation9], 1024
    $region45: #{dqn_forward_padded.1} parent=1 // pred_fallthru
      _
    %v79 = vld [vmem:[#allocation2] sm:$0x3]
    %v80 = vpack.c.bf16 %v79, %v79
    %v81 = vld [vmem:[%s1] sm:$0x3]
    %v82 = vld [vmem:[%s2] sm:$0x1]
    %v84 = vlaneseq
    %v85 = vshrl.u32 %v84, 7
    %v86 = vsub.s32 0, %v85
    %v87 = vrot.slane %v82, %v86
    %vm89 = vcmask 31744
    %v91 = vsel %vm89, %v80, 0
    %vm93 = vcmask 1041408
    %v95 = vsel %vm93, %v81, 0
    %97 = vmatprep.subr.bf16.mxu0 0
    %98 = vmatpush1.bf16.msra.mxu0 0
    %99 = vmatprep.subr.bf16.mxu0 0
    %100 = vmatpush1.bf16.msra.mxu0 0
    %101 = vmatprep.subr.bf16.mxu0 0
    %102 = vmatpush1.bf16.msra.mxu0 0
    %103 = vmatprep.subr.bf16.mxu0 0
    %104 = vmatpush1.bf16.msra.mxu0 0
    %105 = vmatprep.subr.bf16.mxu0 0
    %106 = vmatpush1.bf16.msra.mxu0 0
    %107 = vmatprep.subr.bf16.mxu0 0
    %108 = vmatpush1.bf16.msra.mxu0 0
    %109 = vmatprep.subr.bf16.mxu0 0
    %110 = vmatpush1.bf16.msra.mxu0 0
    %111 = vmatprep.subr.bf16.mxu0 0
    %112 = vmatpush1.bf16.msra.mxu0 %v95
    %113 = vmatprep.subr.bf16.mxu0 0
    %114 = vmatpush2.bf16.msra.mxu0 0
    %115 = vmatprep.subr.bf16.mxu0 0
    %116 = vmatpush2.bf16.msra.mxu0 0
    %117 = vmatprep.subr.bf16.mxu0 0
    %118 = vmatpush2.bf16.msra.mxu0 0
    %119 = vmatprep.subr.bf16.mxu0 0
    %120 = vmatpush2.bf16.msra.mxu0 0
    %121 = vmatprep.subr.bf16.mxu0 0
    %122 = vmatpush2.bf16.msra.mxu0 0
    %123 = vmatprep.subr.bf16.mxu0 0
    %124 = vmatpush2.bf16.msra.mxu0 0
    %125 = vmatprep.subr.bf16.mxu0 0
    %126 = vmatpush2.bf16.msra.mxu0 0
    %127 = vmatprep.subr.bf16.mxu0 0
    %128 = vmatpush2.bf16.msra.mxu0 0
    %129 = vmatprep.mubr.bf16.mxu0 0
    %130 = vmatmul.mubr.bf16.gmra.mxu0 %v91
    %v131 = vpop.f32.mrf.mxu0
    %v132 = vadd.f32 %v87, %v131
    %v133 = vpop.f32.mrf.mxu0
    %v134 = vpop.f32.mrf.mxu0
    %v135 = vpop.f32.mrf.mxu0
    %136 = vdwg.mxu0
    %v137 = vmax.f32 %v132, 0.0
    %v138 = vpack.c.bf16 %v137, %v137
    %v139 = vld [vmem:[#allocation5] sm:$0xf]
    %v140 = vld [vmem:[#allocation5 + $0x4] sm:$0xf]
    %v141 = vld [vmem:[#allocation5 + $0x8] sm:$0xf]
    %v142 = vld [vmem:[#allocation5 + $0xc] sm:$0xf]
    %v143 = vld [vmem:[#allocation5 + $0x10] sm:$0xf]
    %v144 = vld [vmem:[#allocation5 + $0x14] sm:$0xf]
    %v145 = vld [vmem:[#allocation5 + $0x18] sm:$0xf]
    %v146 = vld [vmem:[#allocation5 + $0x1c] sm:$0xf]
    %v147 = vld [vmem:[#allocation5 + $0x20] sm:$0xf]
    %v148 = vld [vmem:[#allocation5 + $0x24] sm:$0xf]
    %v149 = vld [vmem:[#allocation5 + $0x28] sm:$0xf]
    %v150 = vld [vmem:[#allocation5 + $0x2c] sm:$0xf]
    %v151 = vld [vmem:[#allocation5 + $0x30] sm:$0xf]
    %v152 = vld [vmem:[#allocation5 + $0x34] sm:$0xf]
    %v153 = vld [vmem:[#allocation5 + $0x38] sm:$0xf]
    %v154 = vld [vmem:[#allocation5 + $0x3c] sm:$0xf]
    %v155 = vld [vmem:[#allocation7] sm:$0x1]
    %v157 = vlaneseq
    %v158 = vshrl.u32 %v157, 7
    %v159 = vsub.s32 0, %v158
    %v160 = vrot.slane %v155, %v159
    %v178 = vunpack.c.l.b16 %v139
    %v179 = vunpack.c.l.b16 %v140
    %v180 = vunpack.c.l.b16 %v141
    %v181 = vunpack.c.l.b16 %v142
    %v182 = vunpack.c.l.b16 %v143
    %v183 = vunpack.c.l.b16 %v144
    %v184 = vunpack.c.l.b16 %v145
    %v185 = vunpack.c.l.b16 %v146
    %v186 = vunpack.c.l.b16 %v147
    %v187 = vunpack.c.l.b16 %v148
    %v188 = vunpack.c.l.b16 %v149
    %v189 = vunpack.c.l.b16 %v150
    %v190 = vunpack.c.l.b16 %v151
    %v191 = vunpack.c.l.b16 %v152
    %v192 = vunpack.c.l.b16 %v153
    %v193 = vunpack.c.l.b16 %v154
    %v194 = vpack.c.b16 %v179, %v178
    %v195 = vpack.c.b16 %v181, %v180
    %v196 = vpack.c.b16 %v183, %v182
    %v197 = vpack.c.b16 %v185, %v184
    %v198 = vpack.c.b16 %v187, %v186
    %v199 = vpack.c.b16 %v189, %v188
    %v200 = vpack.c.b16 %v191, %v190
    %v201 = vpack.c.b16 %v193, %v192
    %210 = vmatprep.subr.bf16.mxu0 0
    %211 = vmatpush1.bf16.msra.mxu0 %v201
    %212 = vmatprep.subr.bf16.mxu0 0
    %213 = vmatpush1.bf16.msra.mxu0 %v200
    %214 = vmatprep.subr.bf16.mxu0 0
    %215 = vmatpush1.bf16.msra.mxu0 %v199
    %216 = vmatprep.subr.bf16.mxu0 0
    %217 = vmatpush1.bf16.msra.mxu0 %v198
    %218 = vmatprep.subr.bf16.mxu0 0
    %219 = vmatpush1.bf16.msra.mxu0 %v197
    %220 = vmatprep.subr.bf16.mxu0 0
    %221 = vmatpush1.bf16.msra.mxu0 %v196
    %222 = vmatprep.subr.bf16.mxu0 0
    %223 = vmatpush1.bf16.msra.mxu0 %v195
    %224 = vmatprep.subr.bf16.mxu0 0
    %225 = vmatpush1.bf16.msra.mxu0 %v194
    %226 = vmatprep.subr.bf16.mxu0 0
    %227 = vmatpush2.bf16.msra.mxu0 0
    %228 = vmatprep.subr.bf16.mxu0 0
    %229 = vmatpush2.bf16.msra.mxu0 0
    %230 = vmatprep.subr.bf16.mxu0 0
    %231 = vmatpush2.bf16.msra.mxu0 0
    %232 = vmatprep.subr.bf16.mxu0 0
    %233 = vmatpush2.bf16.msra.mxu0 0
    %234 = vmatprep.subr.bf16.mxu0 0
    %235 = vmatpush2.bf16.msra.mxu0 0
    %236 = vmatprep.subr.bf16.mxu0 0
    %237 = vmatpush2.bf16.msra.mxu0 0
    %238 = vmatprep.subr.bf16.mxu0 0
    %239 = vmatpush2.bf16.msra.mxu0 0
    %240 = vmatprep.subr.bf16.mxu0 0
    %241 = vmatpush2.bf16.msra.mxu0 0
    %242 = vmatprep.mubr.bf16.mxu0 0
    %243 = vmatmul.mubr.bf16.gmra.mxu0 %v138
    %v244 = vpop.f32.mrf.mxu0
    %v245 = vadd.f32 %v160, %v244
    %v246 = vpop.f32.mrf.mxu0
    %v247 = vpop.f32.mrf.mxu0
    %v248 = vpop.f32.mrf.mxu0
    %249 = vdwg.mxu0
    %v250 = vmax.f32 %v245, 0.0
    %v251 = vpack.c.bf16 %v250, %v250
    %v252 = vld [vmem:[#allocation8] sm:$0xf]
    %v253 = vld [vmem:[#allocation8 + $0x4] sm:$0xf]
    %v254 = vld [vmem:[#allocation8 + $0x8] sm:$0xf]
    %v255 = vld [vmem:[#allocation8 + $0xc] sm:$0xf]
    %v256 = vld [vmem:[#allocation8 + $0x10] sm:$0xf]
    %v257 = vld [vmem:[#allocation8 + $0x14] sm:$0xf]
    %v258 = vld [vmem:[#allocation8 + $0x18] sm:$0xf]
    %v259 = vld [vmem:[#allocation8 + $0x1c] sm:$0xf]
    %v260 = vld [vmem:[#allocation8 + $0x20] sm:$0xf]
    %v261 = vld [vmem:[#allocation8 + $0x24] sm:$0xf]
    %v262 = vld [vmem:[#allocation8 + $0x28] sm:$0xf]
    %v263 = vld [vmem:[#allocation8 + $0x2c] sm:$0xf]
    %v264 = vld [vmem:[#allocation8 + $0x30] sm:$0xf]
    %v265 = vld [vmem:[#allocation8 + $0x34] sm:$0xf]
    %v266 = vld [vmem:[#allocation8 + $0x38] sm:$0xf]
    %v267 = vld [vmem:[#allocation8 + $0x3c] sm:$0xf]
    %v268 = vld [vmem:[%s6] sm:$0x1]
    %v270 = vlaneseq
    %v271 = vshrl.u32 %v270, 7
    %v272 = vsub.s32 0, %v271
    %v273 = vrot.slane %v268, %v272
    %v291 = vunpack.c.l.b16 %v252
    %v292 = vunpack.c.l.b16 %v253
    %v293 = vunpack.c.l.b16 %v254
    %v294 = vunpack.c.l.b16 %v255
    %v295 = vunpack.c.l.b16 %v256
    %v296 = vunpack.c.l.b16 %v257
    %v297 = vunpack.c.l.b16 %v258
    %v298 = vunpack.c.l.b16 %v259
    %v299 = vunpack.c.l.b16 %v260
    %v300 = vunpack.c.l.b16 %v261
    %v301 = vunpack.c.l.b16 %v262
    %v302 = vunpack.c.l.b16 %v263
    %v303 = vunpack.c.l.b16 %v264
    %v304 = vunpack.c.l.b16 %v265
    %v305 = vunpack.c.l.b16 %v266
    %v306 = vunpack.c.l.b16 %v267
    %v307 = vpack.c.b16 %v292, %v291
    %v308 = vpack.c.b16 %v294, %v293
    %v309 = vpack.c.b16 %v296, %v295
    %v310 = vpack.c.b16 %v298, %v297
    %v311 = vpack.c.b16 %v300, %v299
    %v312 = vpack.c.b16 %v302, %v301
    %v313 = vpack.c.b16 %v304, %v303
    %v314 = vpack.c.b16 %v306, %v305
    %323 = vmatprep.subr.bf16.mxu0 0
    %324 = vmatpush1.bf16.msra.mxu0 %v314
    %325 = vmatprep.subr.bf16.mxu0 0
    %326 = vmatpush1.bf16.msra.mxu0 %v313
    %327 = vmatprep.subr.bf16.mxu0 0
    %328 = vmatpush1.bf16.msra.mxu0 %v312
    %329 = vmatprep.subr.bf16.mxu0 0
    %330 = vmatpush1.bf16.msra.mxu0 %v311
    %331 = vmatprep.subr.bf16.mxu0 0
    %332 = vmatpush1.bf16.msra.mxu0 %v310
    %333 = vmatprep.subr.bf16.mxu0 0
    %334 = vmatpush1.bf16.msra.mxu0 %v309
    %335 = vmatprep.subr.bf16.mxu0 0
    %336 = vmatpush1.bf16.msra.mxu0 %v308
    %337 = vmatprep.subr.bf16.mxu0 0
    %338 = vmatpush1.bf16.msra.mxu0 %v307
    %339 = vmatprep.subr.bf16.mxu0 0
    %340 = vmatpush2.bf16.msra.mxu0 0
    %341 = vmatprep.subr.bf16.mxu0 0
    %342 = vmatpush2.bf16.msra.mxu0 0
    %343 = vmatprep.subr.bf16.mxu0 0
    %344 = vmatpush2.bf16.msra.mxu0 0
    %345 = vmatprep.subr.bf16.mxu0 0
    %346 = vmatpush2.bf16.msra.mxu0 0
    %347 = vmatprep.subr.bf16.mxu0 0
    %348 = vmatpush2.bf16.msra.mxu0 0
    %349 = vmatprep.subr.bf16.mxu0 0
    %350 = vmatpush2.bf16.msra.mxu0 0
    %351 = vmatprep.subr.bf16.mxu0 0
    %352 = vmatpush2.bf16.msra.mxu0 0
    %353 = vmatprep.subr.bf16.mxu0 0
    %354 = vmatpush2.bf16.msra.mxu0 0
    %355 = vmatprep.mubr.bf16.mxu0 0
    %356 = vmatmul.mubr.bf16.gmra.mxu0 %v251
    %v357 = vpop.f32.mrf.mxu0
    %v358 = vadd.f32 %v273, %v357
    %v359 = vpop.f32.mrf.mxu0
    %v360 = vpop.f32.mrf.mxu0
    %v361 = vpop.f32.mrf.mxu0
    %362 = vdwg.mxu0
    %v363 = vpack.c.bf16 %v358, %v358
    %364 = vst [vmem:[#allocation10] sm:$0x1] %v363
    // Predicated region
    $region46: #{dqn_forward_padded.1} parent=1 // pred_check
      _
    $region47: #{dqn_forward_padded.1} parent=1 // pred_check_branch
      %366 = sbr.rel (0) target = $region49
    $region48: #{dqn_forward_padded.1} parent=1 // pred_region
      %s368 = ssub.s32 16, 16
      %369 = vsyncadd [#allocation4], %s368
      %s371 = sshll.u32 [#allocation10], 4
      %s372 = int_to_ptr.vmem [resolvable:$true] %s371
      %374 = dma.vmem_to_hbm [thread:$0]  %s372, 16, %s7, [#allocation4]
    $region49: #{dqn_forward_padded.1} parent=1 // pred_fallthru
      _
    // Predicated region
    $region50: #{dqn_forward_padded.1} parent=1 // pred_check
      _
    $region51: #{dqn_forward_padded.1} parent=1 // pred_check_branch
      %376 = sbr.rel (0) target = $region53
    $region52: #{dqn_forward_padded.1} parent=1 // pred_region
      %377 = dma.done [#allocation4], 16
    $region53: #{dqn_forward_padded.1} parent=1 // pred_fallthru
      _
    %378 = vsyncpa [#allocation3], 1
    %379 = vsyncpa [#allocation6], 1
    %380 = vsyncpa [#allocation9], 1
    %381 = vsyncpa [#allocation4], 1

</llo_original>
